<compile_context>
chip_gen: v7x
topology: tpu7x:2x2x1
jax: 0.10.0
libtpu: 0.0.40
codegen_flags: <defaults>
</compile_context>

<pallas_src>
import math
import jax
import jax.numpy as jnp
from jax.experimental import pallas as pl
from jax.experimental.pallas import tpu as pltpu

LANE = 128
SUBLANE = 8


def _round_up(x, m):
    return ((x + m - 1) // m) * m


# ---------------------------------------------------------------------------
# Fused kernel: head (N-tiled) + all tails (stage-1 concatenated) per batch tile
# ---------------------------------------------------------------------------

def _make_kernel(n_tail, tail_layout):
    """tail_layout: list of static (h_off, h_pad, n_off, n_pad) per tail."""

    def kernel(*refs):
        x_ref, head_w_ref, head_b_ref = refs[0], refs[1], refs[2]
        if n_tail:
            w1_ref, b1_ref, b2_ref = refs[3], refs[4], refs[5]
            w2_refs = refs[6:6 + n_tail]
            head_out_ref, tail_out_ref = refs[6 + n_tail], refs[6 + n_tail + 1]
        else:
            head_out_ref = refs[3]

        j = pl.program_id(1)

        # x tile is DMA'd once per batch tile (constant over j) and reused by
        # every projection; cast once to bf16 so the MXU runs natively.
        x_bf = x_ref[...].astype(jnp.bfloat16)

        # ---- head: one (K, tn) weight slab per j; bf16 x bf16 -> f32 acc ----
        head = jnp.dot(x_bf, head_w_ref[...], preferred_element_type=jnp.float32)
        head_out_ref[...] = (head + head_b_ref[...]).astype(head_out_ref.dtype)

        if n_tail:
            # Tails are independent of the head-N axis: compute once at j == 0.
            # Their packed output block has a constant index over j, so it stays
            # VMEM-resident and is flushed when the batch tile changes.
            @pl.when(j == 0)
            def _():
                # one wide stage-1 matmul over all tails' concatenated W1
                h = jnp.dot(x_bf, w1_ref[...],
                            preferred_element_type=jnp.float32) + b1_ref[...]
                h_bf = h.astype(jnp.bfloat16)
                for t, (h_off, h_pad, n_off, n_pad) in enumerate(tail_layout):
                    y = jnp.dot(h_bf[:, h_off:h_off + h_pad], w2_refs[t][...],
                                preferred_element_type=jnp.float32)
                    y = y + b2_ref[:, n_off:n_off + n_pad]        # f32 epilogue
                    tail_out_ref[:, n_off:n_off + n_pad] = y.astype(
                        tail_out_ref.dtype)

    return kernel


# ---------------------------------------------------------------------------
# Module
# ---------------------------------------------------------------------------

def _init_linear(key, fan_in, fan_out, dtype=jnp.float32):
    """PyTorch-style default init: U(-1/sqrt(fan_in), 1/sqrt(fan_in)).
    Weight stored as (in_features, out_features) so y = x @ W + b."""
    kw, kb = jax.random.split(key)
    bound = 1.0 / math.sqrt(fan_in)
    w = jax.random.uniform(kw, (fan_in, fan_out), dtype, -bound, bound)
    b = jax.random.uniform(kb, (fan_out,), dtype, -bound, bound)
    return w, b


class AdaptiveSoftmaxPallas:
    def __init__(self, input_dim, cutoff, div_value=4.0, key=None,
                 dtype=jnp.float32, head_n_tile=512, batch_tile=256):
        if key is None:
            key = jax.random.PRNGKey(0)
        self.cutoff = list(cutoff)
        self.div_value = div_value
        self.input_dim = input_dim
        self.dtype = dtype
        self.batch_tile = batch_tile

        keys = jax.random.split(key, max(1, 1 + 2 * (len(cutoff) - 1)))

        # ----- head: Linear(input_dim, cutoff[0]) -----
        self.head_w, self.head_b = _init_linear(keys[0], input_dim, cutoff[0],
                                                dtype)
        self.n0 = cutoff[0]
        # head N tile: lane multiple; streams the head weight through VMEM.
        self.tn = min(head_n_tile, _round_up(self.n0, LANE))
        self.n0_pad = _round_up(self.n0, self.tn)
        self.head_w_pad = (jnp.zeros((input_dim, self.n0_pad), jnp.bfloat16)
                           .at[:, :self.n0]
                           .set(self.head_w.astype(jnp.bfloat16)))
        self.head_b_pad = (jnp.zeros((1, self.n0_pad), jnp.float32)
                           .at[0, :self.n0]
                           .set(self.head_b.astype(jnp.float32)))

        # ----- tails: Sequential(Linear(input_dim, hidden_i),
        #                         Linear(hidden_i, cutoff[i]-cutoff[i-1])) -----
        self.tail = []         # true (master) params, for the reference
        self.tail_true = []    # (hidden, out)
        self.tail_layout = []  # (h_off, h_pad, n_off, n_pad) — 128-aligned
        h_off = 0
        n_off = 0
        for i in range(1, len(cutoff)):
            hidden = max(int(input_dim // div_value ** i), 1)  # guard hidden==0
            out = cutoff[i] - cutoff[i - 1]
            w1, b1 = _init_linear(keys[2 * i - 1], input_dim, hidden, dtype)
            w2, b2 = _init_linear(keys[2 * i], hidden, out, dtype)
            self.tail.append((w1, b1, w2, b2))
            h_pad = _round_up(hidden, LANE)
            n_pad = _round_up(out, LANE)
            self.tail_true.append((hidden, out))
            self.tail_layout.append((h_off, h_pad, n_off, n_pad))
            h_off += h_pad
            n_off += n_pad
        self.h_total = h_off
        self.n_tail_total = n_off
        self.n_tail = len(self.tail)

        if self.n_tail:
            # stage-1 tail weights concatenated along N -> one wide matmul
            w1_big = jnp.zeros((input_dim, self.h_total), jnp.bfloat16)
            b1_big = jnp.zeros((1, self.h_total), jnp.float32)
            b2_big = jnp.zeros((1, self.n_tail_total), jnp.float32)
            w2_pads = []
            for (w1, b1, w2, b2), (hid, out), (ho, hp, no, npad) in zip(
                    self.tail, self.tail_true, self.tail_layout):
                w1_big = w1_big.at[:, ho:ho + hid].set(w1.astype(jnp.bfloat16))
                b1_big = b1_big.at[0, ho:ho + hid].set(b1.astype(jnp.float32))
                b2_big = b2_big.at[0, no:no + out].set(b2.astype(jnp.float32))
                w2_pads.append(jnp.zeros((hp, npad), jnp.bfloat16)
                               .at[:hid, :out].set(w2.astype(jnp.bfloat16)))
            self.w1_big, self.b1_big, self.b2_big = w1_big, b1_big, b2_big
            self.w2_pads = w2_pads

    # ---- fused Pallas forward ----------------------------------------------
    def __call__(self, x):
        try:
            return self._forward(x, single_buffer_weights=True)
        except Exception:
            # pl.Buffered(1) unsupported on this build -> default double buffer
            return self._forward(x, single_buffer_weights=False)

    def _forward(self, x, single_buffer_weights):
        B = x.shape[0]
        K = self.input_dim
        tm = min(self.batch_tile, _round_up(B, SUBLANE))
        bt = pl.cdiv(B, tm)            # ragged last batch tile handled by Pallas
        nt = self.n0_pad // self.tn    # head N tiles

        def resident_spec(shape):
            # full-array block, constant index_map -> stays VMEM-resident;
            # single-buffered since the block never changes.
            if single_buffer_weights:
                return pl.BlockSpec(shape, lambda i, j: (0, 0),
                                    pipeline_mode=pl.Buffered(1))
            return pl.BlockSpec(shape, lambda i, j: (0, 0))

        in_specs = [
            pl.BlockSpec((tm, K), lambda i, j: (i, 0)),        # x (resident over j)
            pl.BlockSpec((K, self.tn), lambda i, j: (0, j)),   # head W slab
            pl.BlockSpec((1, self.tn), lambda i, j: (0, j)),   # head bias slab
        ]
        args = [x, self.head_w_pad, self.head_b_pad]
        out_shapes = [jax.ShapeDtypeStruct((B, self.n0_pad), x.dtype)]
        out_specs = [pl.BlockSpec((tm, self.tn), lambda i, j: (i, j))]

        w2_elems = 0
        if self.n_tail:
            in_specs += [resident_spec(self.w1_big.shape),
                         resident_spec(self.b1_big.shape),
                         resident_spec(self.b2_big.shape)]
            args += [self.w1_big, self.b1_big, self.b2_big]
            for w2p in self.w2_pads:
                in_specs.append(resident_spec(w2p.shape))
                args.append(w2p)
                w2_elems += int(w2p.size)
            out_shapes.append(
                jax.ShapeDtypeStruct((B, self.n_tail_total), x.dtype))
            # constant over j: written at j == 0, flushed when the batch tile changes
            out_specs.append(
                pl.BlockSpec((tm, self.n_tail_total), lambda i, j: (i, 0)))

        # ---- scheduler hints ------------------------------------------------
        flops = 2 * B * K * self.n0_pad
        if self.n_tail:
            flops += 2 * B * K * self.h_total
            for (_, hp, _, npad) in self.tail_layout:
                flops += 2 * B * hp * npad
        bytes_accessed = (int(x.size) * x.dtype.itemsize
                          + sum(int(a.size) * a.dtype.itemsize for a in args[1:])
                          + sum(int(s.size) * jnp.dtype(s.dtype).itemsize
                                for s in out_shapes))

        # ---- explicit VMEM budget (double-buffered streamed tiles, weight
        #      residency per single_buffer_weights), with headroom ------------
        wbuf = 1 if single_buffer_weights else 2
        vmem = (tm * K * 4 * 2              # x tile
                + K * self.tn * 2 * 2       # head W slab (bf16)
                + self.tn * 4 * 2           # head bias slab
                + tm * self.tn * 4 * 2)     # head out tile
        if self.n_tail:
            vmem += (K * self.h_total * 2 + self.h_total * 4
                     + self.n_tail_total * 4 + w2_elems * 2) * wbuf
            vmem += tm * self.n_tail_total * 4 * 2
        vmem_limit = int(min(max(2 * vmem + (8 << 20), 32 << 20), 64 << 20))

        outs = pl.pallas_call(
            _make_kernel(self.n_tail, self.tail_layout),
            grid=(bt, nt),
            in_specs=in_specs,
            out_specs=tuple(out_specs),
            out_shape=tuple(out_shapes),
            compiler_params=pltpu.CompilerParams(
                dimension_semantics=("parallel", "arbitrary"),
                vmem_limit_bytes=vmem_limit,
            ),
            cost_estimate=pl.CostEstimate(
                flops=flops, transcendentals=0, bytes_accessed=bytes_accessed),
        )(*args)

        if self.n_tail:
            head_full, tail_full = outs
        else:
            (head_full,) = outs
            return head_full[:B, :self.n0], []

        head_out = head_full[:B, :self.n0]
        tail_out = [tail_full[:B, no:no + out]
                    for (_, out), (_, _, no, _) in zip(self.tail_true,
                                                       self.tail_layout)]
        return head_out, tail_out

    # ---- pure-JAX reference mirroring the kernel's bf16/f32 numerics --------
    def reference(self, x):
        xb = x.astype(jnp.bfloat16)
        head = jnp.dot(xb, self.head_w.astype(jnp.bfloat16),
                       preferred_element_type=jnp.float32) + self.head_b
        tails = []
        for (w1, b1, w2, b2) in self.tail:
            h = jnp.dot(xb, w1.astype(jnp.bfloat16),
                        preferred_element_type=jnp.float32) + b1
            y = jnp.dot(h.astype(jnp.bfloat16), w2.astype(jnp.bfloat16),
                        preferred_element_type=jnp.float32) + b2
            tails.append(y)
        return head.astype(x.dtype), [t.astype(x.dtype) for t in tails]


# ---------------------------------------------------------------------------
# Demo / self-check
# ---------------------------------------------------------------------------

if __name__ == "__main__":
    input_dim = 32
    cutoff = [8, 16, 24]          # head: 32->8, tails: 32->8->8 and 32->2->8
    batch = 8

    key = jax.random.PRNGKey(0)
    k_model, k_x = jax.random.split(key)

    model = AdaptiveSoftmaxPallas(input_dim, cutoff, div_value=4.0, key=k_model)
    x = jax.random.normal(k_x, (batch, input_dim), dtype=jnp.float32)

    head_out, tail_out = model(x)
    head_out = jax.block_until_ready(head_out)
    tail_out = [jax.block_until_ready(t) for t in tail_out]

    # correctness check against a pure-JAX reference with matching numerics
    head_ref, tail_ref = model.reference(x)
    assert head_out.shape == (batch, cutoff[0])
    assert jnp.allclose(head_out, head_ref, atol=2e-2, rtol=2e-2), \
        float(jnp.max(jnp.abs(head_out - head_ref)))
    for i, (t, tr) in enumerate(zip(tail_out, tail_ref), start=1):
        assert t.shape == (batch, cutoff[i] - cutoff[i - 1])
        assert jnp.allclose(t, tr, atol=2e-2, rtol=2e-2), \
            float(jnp.max(jnp.abs(t - tr)))

    print("KERNEL_OK")
</pallas_src>

<mosaic_0001>
module attributes {stable_mosaic.version = 11 : i64} {
  func.func @kernel(%arg0: i32, %arg1: i32, %arg2: memref<8x32xf32, #tpu.memory_space<vmem>>, %arg3: memref<32x128xbf16, #tpu.memory_space<vmem>>, %arg4: memref<1x128xf32, #tpu.memory_space<vmem>>, %arg5: memref<32x256xbf16, #tpu.memory_space<vmem>>, %arg6: memref<1x256xf32, #tpu.memory_space<vmem>>, %arg7: memref<1x256xf32, #tpu.memory_space<vmem>>, %arg8: memref<128x128xbf16, #tpu.memory_space<vmem>>, %arg9: memref<128x128xbf16, #tpu.memory_space<vmem>>, %arg10: memref<8x128xf32, #tpu.memory_space<vmem>>, %arg11: memref<8x256xf32, #tpu.memory_space<vmem>>) attributes {dimension_semantics = [#tpu.dimension_semantics<parallel>, #tpu.dimension_semantics<arbitrary>], iteration_bounds = array<i64: 1, 1>, scalar_prefetch = 0 : i64, scratch_operands = 0 : i64, tpu.core_type = #tpu.core_type<tc>, window_params = [{transform_indices = @transform_0, window_bounds = array<i64: 8, 32>}, {transform_indices = @transform_1, window_bounds = array<i64: 32, 128>}, {transform_indices = @transform_2, window_bounds = array<i64: 1, 128>}, {pipeline_mode = #tpu.pipeline_mode<synchronous>, transform_indices = @transform_3, window_bounds = array<i64: 32, 256>}, {pipeline_mode = #tpu.pipeline_mode<synchronous>, transform_indices = @transform_4, window_bounds = array<i64: 1, 256>}, {pipeline_mode = #tpu.pipeline_mode<synchronous>, transform_indices = @transform_5, window_bounds = array<i64: 1, 256>}, {pipeline_mode = #tpu.pipeline_mode<synchronous>, transform_indices = @transform_6, window_bounds = array<i64: 128, 128>}, {pipeline_mode = #tpu.pipeline_mode<synchronous>, transform_indices = @transform_7, window_bounds = array<i64: 128, 128>}, {transform_indices = @transform_8, window_bounds = array<i64: 8, 128>}, {transform_indices = @transform_9, window_bounds = array<i64: 8, 256>}]} {
    %c0 = arith.constant 0 : index
    %c0_0 = arith.constant 0 : index
    %0 = vector.load %arg2[%c0, %c0_0] : memref<8x32xf32, #tpu.memory_space<vmem>>, vector<8x32xf32>
    %1 = arith.truncf %0 : vector<8x32xf32> to vector<8x32xbf16>
    %c0_1 = arith.constant 0 : index
    %c0_2 = arith.constant 0 : index
    %2 = vector.load %arg3[%c0_1, %c0_2] : memref<32x128xbf16, #tpu.memory_space<vmem>>, vector<32x128xbf16>
    %cst = arith.constant dense<0.000000e+00> : vector<8x128xf32>
    %3 = tpu.matmul %1, %2, %cst {dimension_numbers = #tpu.dot_dimension_numbers<[1], [0], [0], [1], [0, 0, 1, 1], [], []>} : vector<8x32xbf16>, vector<32x128xbf16>, vector<8x128xf32> -> vector<8x128xf32>
    %c0_3 = arith.constant 0 : index
    %c0_4 = arith.constant 0 : index
    %4 = vector.load %arg4[%c0_3, %c0_4] : memref<1x128xf32, #tpu.memory_space<vmem>>, vector<1x128xf32>
    %5 = vector.broadcast %4 : vector<1x128xf32> to vector<8x128xf32>
    %6 = arith.addf %3, %5 : vector<8x128xf32>
    %c0_5 = arith.constant 0 : index
    %c0_6 = arith.constant 0 : index
    %7 = vector.load %arg10[%c0_5, %c0_6] : memref<8x128xf32, #tpu.memory_space<vmem>>, vector<8x128xf32>
    tpu.vector_store %arg10[%c0_5, %c0_6], %6 {strides = array<i32>} : memref<8x128xf32, #tpu.memory_space<vmem>>, vector<8x128xf32>,
    %c0_i32 = arith.constant 0 : i32
    %8 = arith.cmpi eq, %arg1, %c0_i32 : i32
    %9 = arith.extui %8 : i1 to i32
    %c0_i32_7 = arith.constant 0 : i32
    %10 = arith.cmpi ne, %9, %c0_i32_7 : i32
    scf.if %10 {
      %c0_8 = arith.constant 0 : index
      %c0_9 = arith.constant 0 : index
      %11 = vector.load %arg5[%c0_8, %c0_9] : memref<32x256xbf16, #tpu.memory_space<vmem>>, vector<32x256xbf16>
      %cst_10 = arith.constant dense<0.000000e+00> : vector<8x256xf32>
      %12 = tpu.matmul %1, %11, %cst_10 {dimension_numbers = #tpu.dot_dimension_numbers<[1], [0], [0], [1], [0, 0, 1, 1], [], []>} : vector<8x32xbf16>, vector<32x256xbf16>, vector<8x256xf32> -> vector<8x256xf32>
      %c0_11 = arith.constant 0 : index
      %c0_12 = arith.constant 0 : index
      %13 = vector.load %arg6[%c0_11, %c0_12] : memref<1x256xf32, #tpu.memory_space<vmem>>, vector<1x256xf32>
      %14 = vector.broadcast %13 : vector<1x256xf32> to vector<8x256xf32>
      %15 = arith.addf %12, %14 : vector<8x256xf32>
      %16 = arith.truncf %15 : vector<8x256xf32> to vector<8x256xbf16>
      %17 = vector.extract_strided_slice %16 {offsets = [0, 0], sizes = [8, 128], strides = [1, 1]} : vector<8x256xbf16> to vector<8x128xbf16>
      %c0_13 = arith.constant 0 : index
      %c0_14 = arith.constant 0 : index
      %18 = vector.load %arg8[%c0_13, %c0_14] : memref<128x128xbf16, #tpu.memory_space<vmem>>, vector<128x128xbf16>
      %cst_15 = arith.constant dense<0.000000e+00> : vector<8x128xf32>
      %19 = tpu.matmul %17, %18, %cst_15 {dimension_numbers = #tpu.dot_dimension_numbers<[1], [0], [0], [1], [0, 0, 1, 1], [], []>} : vector<8x128xbf16>, vector<128x128xbf16>, vector<8x128xf32> -> vector<8x128xf32>
      %c0_16 = arith.constant 0 : index
      %c0_17 = arith.constant 0 : index
      %20 = vector.load %arg7[%c0_16, %c0_17] : memref<1x256xf32, #tpu.memory_space<vmem>>, vector<1x128xf32>
      %21 = vector.broadcast %20 : vector<1x128xf32> to vector<8x128xf32>
      %22 = arith.addf %19, %21 : vector<8x128xf32>
      %c0_18 = arith.constant 0 : index
      %c0_19 = arith.constant 0 : index
      %23 = vector.load %arg11[%c0_18, %c0_19] : memref<8x256xf32, #tpu.memory_space<vmem>>, vector<8x128xf32>
      tpu.vector_store %arg11[%c0_18, %c0_19], %22 {strides = array<i32>} : memref<8x256xf32, #tpu.memory_space<vmem>>, vector<8x128xf32>,
      %24 = vector.extract_strided_slice %16 {offsets = [0, 128], sizes = [8, 128], strides = [1, 1]} : vector<8x256xbf16> to vector<8x128xbf16>
      %c0_20 = arith.constant 0 : index
      %c0_21 = arith.constant 0 : index
      %25 = vector.load %arg9[%c0_20, %c0_21] : memref<128x128xbf16, #tpu.memory_space<vmem>>, vector<128x128xbf16>
      %cst_22 = arith.constant dense<0.000000e+00> : vector<8x128xf32>
      %26 = tpu.matmul %24, %25, %cst_22 {dimension_numbers = #tpu.dot_dimension_numbers<[1], [0], [0], [1], [0, 0, 1, 1], [], []>} : vector<8x128xbf16>, vector<128x128xbf16>, vector<8x128xf32> -> vector<8x128xf32>
      %c0_23 = arith.constant 0 : index
      %c128 = arith.constant 128 : index
      %27 = vector.load %arg7[%c0_23, %c128] : memref<1x256xf32, #tpu.memory_space<vmem>>, vector<1x128xf32>
      %28 = vector.broadcast %27 : vector<1x128xf32> to vector<8x128xf32>
      %29 = arith.addf %26, %28 : vector<8x128xf32>
      %c0_24 = arith.constant 0 : index
      %c128_25 = arith.constant 128 : index
      %30 = vector.load %arg11[%c0_24, %c128_25] : memref<8x256xf32, #tpu.memory_space<vmem>>, vector<8x128xf32>
      tpu.vector_store %arg11[%c0_24, %c128_25], %29 {strides = array<i32>} : memref<8x256xf32, #tpu.memory_space<vmem>>, vector<8x128xf32>,
    } else {
    }
    return
  }
  func.func @transform_0(%arg0: i32, %arg1: i32) -> (i32, i32) {
    %c0_i32 = arith.constant 0 : i32
    %c0_i32_0 = arith.constant 0 : i32
    return %arg0, %c0_i32 : i32, i32
  }
  func.func @transform_1(%arg0: i32, %arg1: i32) -> (i32, i32) {
    %c0_i32 = arith.constant 0 : i32
    %c0_i32_0 = arith.constant 0 : i32
    return %c0_i32, %arg1 : i32, i32
  }
  func.func @transform_2(%arg0: i32, %arg1: i32) -> (i32, i32) {
    %c0_i32 = arith.constant 0 : i32
    %c0_i32_0 = arith.constant 0 : i32
    return %c0_i32, %arg1 : i32, i32
  }
  func.func @transform_3(%arg0: i32, %arg1: i32) -> (i32, i32) {
    %c0_i32 = arith.constant 0 : i32
    %c0_i32_0 = arith.constant 0 : i32
    %c0_i32_1 = arith.constant 0 : i32
    return %c0_i32, %c0_i32_0 : i32, i32
  }
  func.func @transform_4(%arg0: i32, %arg1: i32) -> (i32, i32) {
    %c0_i32 = arith.constant 0 : i32
    %c0_i32_0 = arith.constant 0 : i32
    %c0_i32_1 = arith.constant 0 : i32
    return %c0_i32, %c0_i32_0 : i32, i32
  }
  func.func @transform_5(%arg0: i32, %arg1: i32) -> (i32, i32) {
    %c0_i32 = arith.constant 0 : i32
    %c0_i32_0 = arith.constant 0 : i32
    %c0_i32_1 = arith.constant 0 : i32
    return %c0_i32, %c0_i32_0 : i32, i32
  }
  func.func @transform_6(%arg0: i32, %arg1: i32) -> (i32, i32) {
    %c0_i32 = arith.constant 0 : i32
    %c0_i32_0 = arith.constant 0 : i32
    %c0_i32_1 = arith.constant 0 : i32
    return %c0_i32, %c0_i32_0 : i32, i32
  }
  func.func @transform_7(%arg0: i32, %arg1: i32) -> (i32, i32) {
    %c0_i32 = arith.constant 0 : i32
    %c0_i32_0 = arith.constant 0 : i32
    %c0_i32_1 = arith.constant 0 : i32
    return %c0_i32, %c0_i32_0 : i32, i32
  }
  func.func @transform_8(%arg0: i32, %arg1: i32) -> (i32, i32) {
    %c0_i32 = arith.constant 0 : i32
    return %arg0, %arg1 : i32, i32
  }
  func.func @transform_9(%arg0: i32, %arg1: i32) -> (i32, i32) {
    %c0_i32 = arith.constant 0 : i32
    %c0_i32_0 = arith.constant 0 : i32
    return %arg0, %c0_i32 : i32, i32
  }
}

module attributes {stable_mosaic.version = 11 : i64} {
  func.func @kernel(%arg0: i32, %arg1: i32, %arg2: memref<8x32xf32, #tpu.memory_space<vmem>>, %arg3: memref<32x128xbf16, #tpu.memory_space<vmem>>, %arg4: memref<1x128xf32, #tpu.memory_space<vmem>>, %arg5: memref<32x256xbf16, #tpu.memory_space<vmem>>, %arg6: memref<1x256xf32, #tpu.memory_space<vmem>>, %arg7: memref<1x256xf32, #tpu.memory_space<vmem>>, %arg8: memref<128x128xbf16, #tpu.memory_space<vmem>>, %arg9: memref<128x128xbf16, #tpu.memory_space<vmem>>, %arg10: memref<8x128xf32, #tpu.memory_space<vmem>>, %arg11: memref<8x256xf32, #tpu.memory_space<vmem>>) attributes {dimension_semantics = [#tpu.dimension_semantics<parallel>, #tpu.dimension_semantics<arbitrary>], iteration_bounds = array<i64: 1, 1>, scalar_prefetch = 0 : i64, scratch_operands = 0 : i64, tpu.core_type = #tpu.core_type<tc>, window_params = [{transform_indices = @transform_0, window_bounds = array<i64: 8, 32>}, {transform_indices = @transform_1, window_bounds = array<i64: 32, 128>}, {transform_indices = @transform_2, window_bounds = array<i64: 1, 128>}, {pipeline_mode = #tpu.pipeline_mode<synchronous>, transform_indices = @transform_3, window_bounds = array<i64: 32, 256>}, {pipeline_mode = #tpu.pipeline_mode<synchronous>, transform_indices = @transform_4, window_bounds = array<i64: 1, 256>}, {pipeline_mode = #tpu.pipeline_mode<synchronous>, transform_indices = @transform_5, window_bounds = array<i64: 1, 256>}, {pipeline_mode = #tpu.pipeline_mode<synchronous>, transform_indices = @transform_6, window_bounds = array<i64: 128, 128>}, {pipeline_mode = #tpu.pipeline_mode<synchronous>, transform_indices = @transform_7, window_bounds = array<i64: 128, 128>}, {transform_indices = @transform_8, window_bounds = array<i64: 8, 128>}, {transform_indices = @transform_9, window_bounds = array<i64: 8, 256>}]} {
    %c0 = arith.constant 0 : index
    %c0_0 = arith.constant 0 : index
    %0 = vector.load %arg2[%c0, %c0_0] : memref<8x32xf32, #tpu.memory_space<vmem>>, vector<8x32xf32>
    %1 = arith.truncf %0 : vector<8x32xf32> to vector<8x32xbf16>
    %c0_1 = arith.constant 0 : index
    %c0_2 = arith.constant 0 : index
    %2 = vector.load %arg3[%c0_1, %c0_2] : memref<32x128xbf16, #tpu.memory_space<vmem>>, vector<32x128xbf16>
    %cst = arith.constant dense<0.000000e+00> : vector<8x128xf32>
    %3 = tpu.matmul %1, %2, %cst {dimension_numbers = #tpu.dot_dimension_numbers<[1], [0], [0], [1], [0, 0, 1, 1], [], []>} : vector<8x32xbf16>, vector<32x128xbf16>, vector<8x128xf32> -> vector<8x128xf32>
    %c0_3 = arith.constant 0 : index
    %c0_4 = arith.constant 0 : index
    %4 = vector.load %arg4[%c0_3, %c0_4] : memref<1x128xf32, #tpu.memory_space<vmem>>, vector<1x128xf32>
    %5 = vector.broadcast %4 : vector<1x128xf32> to vector<8x128xf32>
    %6 = arith.addf %3, %5 : vector<8x128xf32>
    %c0_5 = arith.constant 0 : index
    %c0_6 = arith.constant 0 : index
    %7 = vector.load %arg10[%c0_5, %c0_6] : memref<8x128xf32, #tpu.memory_space<vmem>>, vector<8x128xf32>
    tpu.vector_store %arg10[%c0_5, %c0_6], %6 {strides = array<i32>} : memref<8x128xf32, #tpu.memory_space<vmem>>, vector<8x128xf32>,
    %c0_i32 = arith.constant 0 : i32
    %8 = arith.cmpi eq, %arg1, %c0_i32 : i32
    %9 = arith.extui %8 : i1 to i32
    %c0_i32_7 = arith.constant 0 : i32
    %10 = arith.cmpi ne, %9, %c0_i32_7 : i32
    scf.if %10 {
      %c0_8 = arith.constant 0 : index
      %c0_9 = arith.constant 0 : index
      %11 = vector.load %arg5[%c0_8, %c0_9] : memref<32x256xbf16, #tpu.memory_space<vmem>>, vector<32x256xbf16>
      %cst_10 = arith.constant dense<0.000000e+00> : vector<8x256xf32>
      %12 = tpu.matmul %1, %11, %cst_10 {dimension_numbers = #tpu.dot_dimension_numbers<[1], [0], [0], [1], [0, 0, 1, 1], [], []>} : vector<8x32xbf16>, vector<32x256xbf16>, vector<8x256xf32> -> vector<8x256xf32>
      %c0_11 = arith.constant 0 : index
      %c0_12 = arith.constant 0 : index
      %13 = vector.load %arg6[%c0_11, %c0_12] : memref<1x256xf32, #tpu.memory_space<vmem>>, vector<1x256xf32>
      %14 = vector.broadcast %13 : vector<1x256xf32> to vector<8x256xf32>
      %15 = arith.addf %12, %14 : vector<8x256xf32>
      %16 = arith.truncf %15 : vector<8x256xf32> to vector<8x256xbf16>
      %17 = vector.extract_strided_slice %16 {offsets = [0, 0], sizes = [8, 128], strides = [1, 1]} : vector<8x256xbf16> to vector<8x128xbf16>
      %c0_13 = arith.constant 0 : index
      %c0_14 = arith.constant 0 : index
      %18 = vector.load %arg8[%c0_13, %c0_14] : memref<128x128xbf16, #tpu.memory_space<vmem>>, vector<128x128xbf16>
      %cst_15 = arith.constant dense<0.000000e+00> : vector<8x128xf32>
      %19 = tpu.matmul %17, %18, %cst_15 {dimension_numbers = #tpu.dot_dimension_numbers<[1], [0], [0], [1], [0, 0, 1, 1], [], []>} : vector<8x128xbf16>, vector<128x128xbf16>, vector<8x128xf32> -> vector<8x128xf32>
      %c0_16 = arith.constant 0 : index
      %c0_17 = arith.constant 0 : index
      %20 = vector.load %arg7[%c0_16, %c0_17] : memref<1x256xf32, #tpu.memory_space<vmem>>, vector<1x128xf32>
      %21 = vector.broadcast %20 : vector<1x128xf32> to vector<8x128xf32>
      %22 = arith.addf %19, %21 : vector<8x128xf32>
      %c0_18 = arith.constant 0 : index
      %c0_19 = arith.constant 0 : index
      %23 = vector.load %arg11[%c0_18, %c0_19] : memref<8x256xf32, #tpu.memory_space<vmem>>, vector<8x128xf32>
      tpu.vector_store %arg11[%c0_18, %c0_19], %22 {strides = array<i32>} : memref<8x256xf32, #tpu.memory_space<vmem>>, vector<8x128xf32>,
      %24 = vector.extract_strided_slice %16 {offsets = [0, 128], sizes = [8, 128], strides = [1, 1]} : vector<8x256xbf16> to vector<8x128xbf16>
      %c0_20 = arith.constant 0 : index
      %c0_21 = arith.constant 0 : index
      %25 = vector.load %arg9[%c0_20, %c0_21] : memref<128x128xbf16, #tpu.memory_space<vmem>>, vector<128x128xbf16>
      %cst_22 = arith.constant dense<0.000000e+00> : vector<8x128xf32>
      %26 = tpu.matmul %24, %25, %cst_22 {dimension_numbers = #tpu.dot_dimension_numbers<[1], [0], [0], [1], [0, 0, 1, 1], [], []>} : vector<8x128xbf16>, vector<128x128xbf16>, vector<8x128xf32> -> vector<8x128xf32>
      %c0_23 = arith.constant 0 : index
      %c128 = arith.constant 128 : index
      %27 = vector.load %arg7[%c0_23, %c128] : memref<1x256xf32, #tpu.memory_space<vmem>>, vector<1x128xf32>
      %28 = vector.broadcast %27 : vector<1x128xf32> to vector<8x128xf32>
      %29 = arith.addf %26, %28 : vector<8x128xf32>
      %c0_24 = arith.constant 0 : index
      %c128_25 = arith.constant 128 : index
      %30 = vector.load %arg11[%c0_24, %c128_25] : memref<8x256xf32, #tpu.memory_space<vmem>>, vector<8x128xf32>
      tpu.vector_store %arg11[%c0_24, %c128_25], %29 {strides = array<i32>} : memref<8x256xf32, #tpu.memory_space<vmem>>, vector<8x128xf32>,
    } else {
    }
    return
  }
  func.func @transform_0(%arg0: i32, %arg1: i32) -> (i32, i32) {
    %c0_i32 = arith.constant 0 : i32
    %c0_i32_0 = arith.constant 0 : i32
    return %arg0, %c0_i32 : i32, i32
  }
  func.func @transform_1(%arg0: i32, %arg1: i32) -> (i32, i32) {
    %c0_i32 = arith.constant 0 : i32
    %c0_i32_0 = arith.constant 0 : i32
    return %c0_i32, %arg1 : i32, i32
  }
  func.func @transform_2(%arg0: i32, %arg1: i32) -> (i32, i32) {
    %c0_i32 = arith.constant 0 : i32
    %c0_i32_0 = arith.constant 0 : i32
    return %c0_i32, %arg1 : i32, i32
  }
  func.func @transform_3(%arg0: i32, %arg1: i32) -> (i32, i32) {
    %c0_i32 = arith.constant 0 : i32
    %c0_i32_0 = arith.constant 0 : i32
    %c0_i32_1 = arith.constant 0 : i32
    return %c0_i32, %c0_i32_0 : i32, i32
  }
  func.func @transform_4(%arg0: i32, %arg1: i32) -> (i32, i32) {
    %c0_i32 = arith.constant 0 : i32
    %c0_i32_0 = arith.constant 0 : i32
    %c0_i32_1 = arith.constant 0 : i32
    return %c0_i32, %c0_i32_0 : i32, i32
  }
  func.func @transform_5(%arg0: i32, %arg1: i32) -> (i32, i32) {
    %c0_i32 = arith.constant 0 : i32
    %c0_i32_0 = arith.constant 0 : i32
    %c0_i32_1 = arith.constant 0 : i32
    return %c0_i32, %c0_i32_0 : i32, i32
  }
  func.func @transform_6(%arg0: i32, %arg1: i32) -> (i32, i32) {
    %c0_i32 = arith.constant 0 : i32
    %c0_i32_0 = arith.constant 0 : i32
    %c0_i32_1 = arith.constant 0 : i32
    return %c0_i32, %c0_i32_0 : i32, i32
  }
  func.func @transform_7(%arg0: i32, %arg1: i32) -> (i32, i32) {
    %c0_i32 = arith.constant 0 : i32
    %c0_i32_0 = arith.constant 0 : i32
    %c0_i32_1 = arith.constant 0 : i32
    return %c0_i32, %c0_i32_0 : i32, i32
  }
  func.func @transform_8(%arg0: i32, %arg1: i32) -> (i32, i32) {
    %c0_i32 = arith.constant 0 : i32
    return %arg0, %arg1 : i32, i32
  }
  func.func @transform_9(%arg0: i32, %arg1: i32) -> (i32, i32) {
    %c0_i32 = arith.constant 0 : i32
    %c0_i32_0 = arith.constant 0 : i32
    return %arg0, %c0_i32 : i32, i32
  }
}

</mosaic_0001>

<llo_original>
// kernel: tpu_custom_call.1
$region0: #{tpu_custom_call.1}
  #allocation0 [shape = 'u32[]', space=smem, size = 0x4, offset = 0x4, fixed_abs, tag = 'smem constant byte address 0x4 - core index']
  #allocation1 [shape = 'u32[144,128]{1,0:T(1,128)}', space=vmem, size = 0x12000, scoped, tag = 'internal scratch']
  %s0 = inlined_call_operand.hbm [shape: f32[8,32], index: 0, kind: input, shape index: {}]
  %s1 = inlined_call_operand.hbm [shape: bf16[32,128], index: 1, kind: input, shape index: {}]
  %s2 = inlined_call_operand.vmem [shape: f32[1,128], index: 2, kind: input, shape index: {}]
  %s3 = inlined_call_operand.hbm [shape: bf16[32,256], index: 3, kind: input, shape index: {}]
  %s4 = inlined_call_operand.vmem [shape: f32[1,256], index: 4, kind: input, shape index: {}]
  %s5 = inlined_call_operand.vmem [shape: f32[1,256], index: 5, kind: input, shape index: {}]
  %s6 = inlined_call_operand.hbm [shape: bf16[128,128], index: 6, kind: input, shape index: {}]
  %s7 = inlined_call_operand.hbm [shape: bf16[128,128], index: 7, kind: input, shape index: {}]
  %s8 = inlined_call_operand.hbm [shape: f32[8,128], index: 8, kind: output, shape index: {0}]
  %s9 = inlined_call_operand.hbm [shape: f32[8,256], index: 9, kind: output, shape index: {1}]
  %10 = xla_tuple %s8, %s9
  %s11 = sld [smem:[#allocation0]]
  $region74: #{tpu_custom_call.1} parent=0
    _
  %s13 = ssub.s32 1, %s11
  %s14 = scalar_select 0, %s13, %s11
  $region1: #{tpu_custom_call.1} parent=0
    #allocation2 [shape = 'u8[4096]{0}', space=vmem, size = 0x1000, scoped, tag = 'input window, operand 0, single buffered']
    #allocation3 [shape = 's32[1]{0}', space=sflag, size = 0x4, scoped, tag = 'scoped memory for tpu_custom_call.1']
    #allocation4 [shape = 's32[1]{0}', space=sflag, size = 0x4, scoped, tag = 'scoped memory for tpu_custom_call.1']
    #allocation5 [shape = 'u8[8192]{0}', space=vmem, size = 0x2000, scoped, tag = 'input window, operand 1, single buffered']
    #allocation6 [shape = 's32[1]{0}', space=sflag, size = 0x4, scoped, tag = 'scoped memory for tpu_custom_call.1']
    #allocation7 [shape = 'u8[16384]{0}', space=vmem, size = 0x4000, scoped, tag = 'input window, operand 3, single buffered']
    #allocation8 [shape = 'u8[32768]{0}', space=vmem, size = 0x8000, scoped, tag = 'input window, operand 6, single buffered']
    #allocation9 [shape = 's32[1]{0}', space=sflag, size = 0x4, scoped, tag = 'scoped memory for tpu_custom_call.1']
    #allocation10 [shape = 'u8[32768]{0}', space=vmem, size = 0x8000, scoped, tag = 'input window, operand 7, single buffered']
    #allocation11 [shape = 'u8[4096]{0}', space=vmem, size = 0x1000, scoped, tag = 'output window, operand 0, single buffered']
    #allocation12 [shape = 'u8[8192]{0}', space=vmem, size = 0x2000, scoped, tag = 'output window, operand 1, single buffered']
    #allocation13 [shape = 's32[1]{0}', space=sflag, size = 0x4, scoped, tag = 'scoped memory for tpu_custom_call.1']
    %15 = vsyncpa [#allocation3], 0
    %16 = vsyncpa [#allocation6], 0
    %17 = vsyncpa [#allocation9], 0
    %18 = vsyncpa [#allocation4], 0
    %19 = vsyncpa [#allocation13], 0
    // Predicated region
    $region2: #{tpu_custom_call.1} parent=1 // pred_check
      _
    $region3: #{tpu_custom_call.1} parent=1 // pred_check_branch
      %21 = sbr.rel (0) target = $region5
    $region4: #{tpu_custom_call.1} parent=1 // pred_region
      %s23 = ssub.s32 128, 128
      %24 = vsyncadd [#allocation3], %s23
      %s26 = sshll.u32 [#allocation2], 4
      %s27 = int_to_ptr.vmem [resolvable:$true] %s26
      %29 = dma.hbm_to_vmem [thread:$0]  %s0, 128, %s27, [#allocation3]
    $region5: #{tpu_custom_call.1} parent=1 // pred_fallthru
      _
    // Predicated region
    $region6: #{tpu_custom_call.1} parent=1 // pred_check
      _
    $region7: #{tpu_custom_call.1} parent=1 // pred_check_branch
      %31 = sbr.rel (0) target = $region9
    $region8: #{tpu_custom_call.1} parent=1 // pred_region
      %s33 = ssub.s32 256, 256
      %34 = vsyncadd [#allocation6], %s33
      %s35 = sshll.u32 [#allocation5], 4
      %s36 = int_to_ptr.vmem [resolvable:$true] %s35
      %41 = dma.hbm_to_vmem [thread:$0]  %s1, 256, %s36, [#allocation6], 64, 64, 4
    $region9: #{tpu_custom_call.1} parent=1 // pred_fallthru
      _
    // Predicated region
    $region10: #{tpu_custom_call.1} parent=1 // pred_check
      _
    $region11: #{tpu_custom_call.1} parent=1 // pred_check_branch
      %43 = sbr.rel (0) target = $region13
    $region12: #{tpu_custom_call.1} parent=1 // pred_region
      _
    $region13: #{tpu_custom_call.1} parent=1 // pred_fallthru
      _
    // Predicated region
    $region14: #{tpu_custom_call.1} parent=1 // pred_check
      _
    $region15: #{tpu_custom_call.1} parent=1 // pred_check_branch
      %45 = sbr.rel (0) target = $region17
    $region16: #{tpu_custom_call.1} parent=1 // pred_region
      %s47 = ssub.s32 512, 512
      %48 = vsyncadd [#allocation6], %s47
      %s49 = sshll.u32 [#allocation7], 4
      %s50 = int_to_ptr.vmem [resolvable:$true] %s49
      %55 = dma.hbm_to_vmem [thread:$0]  %s3, 512, %s50, [#allocation6], 128, 128, 8
    $region17: #{tpu_custom_call.1} parent=1 // pred_fallthru
      _
    // Predicated region
    $region18: #{tpu_custom_call.1} parent=1 // pred_check
      _
    $region19: #{tpu_custom_call.1} parent=1 // pred_check_branch
      %57 = sbr.rel (0) target = $region21
    $region20: #{tpu_custom_call.1} parent=1 // pred_region
      _
    $region21: #{tpu_custom_call.1} parent=1 // pred_fallthru
      _
    // Predicated region
    $region22: #{tpu_custom_call.1} parent=1 // pred_check
      _
    $region23: #{tpu_custom_call.1} parent=1 // pred_check_branch
      %59 = sbr.rel (0) target = $region25
    $region24: #{tpu_custom_call.1} parent=1 // pred_region
      _
    $region25: #{tpu_custom_call.1} parent=1 // pred_fallthru
      _
    // Predicated region
    $region26: #{tpu_custom_call.1} parent=1 // pred_check
      _
    $region27: #{tpu_custom_call.1} parent=1 // pred_check_branch
      %61 = sbr.rel (0) target = $region29
    $region28: #{tpu_custom_call.1} parent=1 // pred_region
      %s63 = ssub.s32 1024, 1024
      %64 = vsyncadd [#allocation9], %s63
      %s65 = sshll.u32 [#allocation8], 4
      %s66 = int_to_ptr.vmem [resolvable:$true] %s65
      %71 = dma.hbm_to_vmem [thread:$0]  %s6, 1024, %s66, [#allocation9], 64, 64, 4
    $region29: #{tpu_custom_call.1} parent=1 // pred_fallthru
      _
    // Predicated region
    $region30: #{tpu_custom_call.1} parent=1 // pred_check
      _
    $region31: #{tpu_custom_call.1} parent=1 // pred_check_branch
      %73 = sbr.rel (0) target = $region33
    $region32: #{tpu_custom_call.1} parent=1 // pred_region
      %s75 = ssub.s32 1024, 1024
      %76 = vsyncadd [#allocation9], %s75
      %s77 = sshll.u32 [#allocation10], 4
      %s78 = int_to_ptr.vmem [resolvable:$true] %s77
      %83 = dma.hbm_to_vmem [thread:$0]  %s7, 1024, %s78, [#allocation9], 64, 64, 4
    $region33: #{tpu_custom_call.1} parent=1 // pred_fallthru
      _
    // Predicated region
    $region34: #{tpu_custom_call.1} parent=1 // pred_check
      _
    $region35: #{tpu_custom_call.1} parent=1 // pred_check_branch
      %85 = sbr.rel (0) target = $region37
    $region36: #{tpu_custom_call.1} parent=1 // pred_region
      %86 = dma.done [#allocation3], 128
    $region37: #{tpu_custom_call.1} parent=1 // pred_fallthru
      _
    // Predicated region
    $region38: #{tpu_custom_call.1} parent=1 // pred_check
      _
    $region39: #{tpu_custom_call.1} parent=1 // pred_check_branch
      %88 = sbr.rel (0) target = $region41
    $region40: #{tpu_custom_call.1} parent=1 // pred_region
      %89 = dma.done [#allocation6], 256
    $region41: #{tpu_custom_call.1} parent=1 // pred_fallthru
      _
    // Predicated region
    $region42: #{tpu_custom_call.1} parent=1 // pred_check
      _
    $region43: #{tpu_custom_call.1} parent=1 // pred_check_branch
      %91 = sbr.rel (0) target = $region45
    $region44: #{tpu_custom_call.1} parent=1 // pred_region
      %92 = dma.done [#allocation6], 512
    $region45: #{tpu_custom_call.1} parent=1 // pred_fallthru
      _
    // Predicated region
    $region46: #{tpu_custom_call.1} parent=1 // pred_check
      _
    $region47: #{tpu_custom_call.1} parent=1 // pred_check_branch
      %94 = sbr.rel (0) target = $region49
    $region48: #{tpu_custom_call.1} parent=1 // pred_region
      %95 = dma.done [#allocation9], 1024
    $region49: #{tpu_custom_call.1} parent=1 // pred_fallthru
      _
    // Predicated region
    $region50: #{tpu_custom_call.1} parent=1 // pred_check
      _
    $region51: #{tpu_custom_call.1} parent=1 // pred_check_branch
      %97 = sbr.rel (0) target = $region53
    $region52: #{tpu_custom_call.1} parent=1 // pred_region
      %98 = dma.done [#allocation9], 1024
    $region53: #{tpu_custom_call.1} parent=1 // pred_fallthru
      _
    %v100 = vld [vmem:[#allocation2] sm:$0xff]
    %v101 = vpack.c.bf16 %v100, %v100
    %v102 = vld [vmem:[#allocation5] sm:$0xf]
    %v103 = vld [vmem:[#allocation5 + $0x4] sm:$0xf]
    %v104 = vld [vmem:[#allocation5 + $0x8] sm:$0xf]
    %v105 = vld [vmem:[#allocation5 + $0xc] sm:$0xf]
    %v106 = vld [vmem:[%s2] sm:$0x1]
    %v108 = vlaneseq
    %v109 = vshrl.u32 %v108, 7
    %v110 = vsub.s32 0, %v109
    %v111 = vrot.slane %v106, %v110
    %v117 = vunpack.c.l.b16 %v102
    %v118 = vunpack.c.l.b16 %v103
    %v119 = vunpack.c.l.b16 %v104
    %v120 = vunpack.c.l.b16 %v105
    %v121 = vpack.c.b16 %v118, %v117
    %v122 = vpack.c.b16 %v120, %v119
    %vm125 = vcmask 261120
    %v127 = vsel %vm125, %v101, 0
    %129 = vmatprep.subr.bf16.mxu0 0
    %130 = vmatpush1.bf16.msra.mxu0 %v121
    %131 = vmatprep.subr.bf16.mxu0 0
    %132 = vmatpush1.bf16.msra.mxu0 %v122
    %133 = vmatprep.subr.bf16.mxu0 0
    %134 = vmatpush1.bf16.msra.mxu0 0
    %135 = vmatprep.subr.bf16.mxu0 0
    %136 = vmatpush1.bf16.msra.mxu0 0
    %137 = vmatprep.subr.bf16.mxu0 0
    %138 = vmatpush1.bf16.msra.mxu0 0
    %139 = vmatprep.subr.bf16.mxu0 0
    %140 = vmatpush1.bf16.msra.mxu0 0
    %141 = vmatprep.subr.bf16.mxu0 0
    %142 = vmatpush1.bf16.msra.mxu0 0
    %143 = vmatprep.subr.bf16.mxu0 0
    %144 = vmatpush1.bf16.msra.mxu0 0
    %145 = vmatprep.subr.bf16.mxu0 0
    %146 = vmatpush1.bf16.msra.mxu0 0
    %147 = vmatprep.subr.bf16.mxu0 0
    %148 = vmatpush1.bf16.msra.mxu0 0
    %149 = vmatprep.subr.bf16.mxu0 0
    %150 = vmatpush1.bf16.msra.mxu0 0
    %151 = vmatprep.subr.bf16.mxu0 0
    %152 = vmatpush1.bf16.msra.mxu0 0
    %153 = vmatprep.subr.bf16.mxu0 0
    %154 = vmatpush1.bf16.msra.mxu0 0
    %155 = vmatprep.subr.bf16.mxu0 0
    %156 = vmatpush1.bf16.msra.mxu0 0
    %157 = vmatprep.subr.bf16.mxu0 0
    %158 = vmatpush1.bf16.msra.mxu0 0
    %159 = vmatprep.subr.bf16.mxu0 0
    %160 = vmatpush1.bf16.msra.mxu0 0
    %161 = vmatprep.mubr.bf16.mxu0 0
    %162 = vmatmul.mubr.bf16.gmra.mrb[0].mxu0 %v127
    %v163 = vpop.f32.mrb[0].mxu0
    %v164 = vadd.f32 %v111, %v163
    %v165 = vpop.f32.mrb[0].mxu0
    %v166 = vpop.f32.mrb[0].mxu0
    %v167 = vpop.f32.mrb[0].mxu0
    %168 = vdwg.mxu0
    %169 = vst [vmem:[#allocation11] sm:$0xff] %v164
    %p170 = scmp.eq.s32.totalorder 0, 0
    // Predicated region
    $region54: #{tpu_custom_call.1} parent=1 // pred_check
      %p171 = pneg %p170
    $region55: #{tpu_custom_call.1} parent=1 // pred_check_branch
      %173 = sbr.rel (%p171) target = $region57
    $region56: #{tpu_custom_call.1} parent=1 // pred_region
      %v174 = vld [vmem:[#allocation7] sm:$0xff]
      %v175 = vld [vmem:[#allocation7 + $0x8] sm:$0xff]
      %v176 = vld [vmem:[#allocation7 + $0x10] sm:$0xff]
      %v177 = vld [vmem:[#allocation7 + $0x18] sm:$0xff]
      %v178 = vld [vmem:[%s4] sm:$0x3]
      %v180 = vlaneseq
      %v181 = vshrl.u32 %v180, 7
      %v182 = vsub.s32 0, %v181
      %v183 = vrot.slane %v178, %v182
      %v184 = vlaneseq
      %v185 = vshrl.u32 %v184, 7
      %v186 = vsub.s32 1, %v185
      %v187 = vrot.slane %v178, %v186
      %v194 = vunpack.c.l.b16 %v174
      %v195 = vunpack.c.h.b16 %v174
      %v196 = vunpack.c.l.b16 %v175
      %v197 = vunpack.c.h.b16 %v175
      %v198 = vunpack.c.l.b16 %v176
      %v199 = vunpack.c.h.b16 %v176
      %v200 = vunpack.c.l.b16 %v177
      %v201 = vunpack.c.h.b16 %v177
      %v202 = vpack.c.b16 %v196, %v194
      %v203 = vpack.c.b16 %v197, %v195
      %v204 = vpack.c.b16 %v200, %v198
      %v205 = vpack.c.b16 %v201, %v199
      %210 = vmatprep.subr.bf16.mxu0 %v203
      %211 = vmatpush1.bf16.msra.mxu0 %v202
      %212 = vmatprep.subr.bf16.mxu0 %v205
      %213 = vmatpush1.bf16.msra.mxu0 %v204
      %214 = vmatprep.subr.bf16.mxu0 0
      %215 = vmatpush1.bf16.msra.mxu0 0
      %216 = vmatprep.subr.bf16.mxu0 0
      %217 = vmatpush1.bf16.msra.mxu0 0
      %218 = vmatprep.subr.bf16.mxu0 0
      %219 = vmatpush1.bf16.msra.mxu0 0
      %220 = vmatprep.subr.bf16.mxu0 0
      %221 = vmatpush1.bf16.msra.mxu0 0
      %222 = vmatprep.subr.bf16.mxu0 0
      %223 = vmatpush1.bf16.msra.mxu0 0
      %224 = vmatprep.subr.bf16.mxu0 0
      %225 = vmatpush1.bf16.msra.mxu0 0
      %226 = vmatprep.subr.bf16.mxu0 0
      %227 = vmatpush1.bf16.msra.mxu0 0
      %228 = vmatprep.subr.bf16.mxu0 0
      %229 = vmatpush1.bf16.msra.mxu0 0
      %230 = vmatprep.subr.bf16.mxu0 0
      %231 = vmatpush1.bf16.msra.mxu0 0
      %232 = vmatprep.subr.bf16.mxu0 0
      %233 = vmatpush1.bf16.msra.mxu0 0
      %234 = vmatprep.subr.bf16.mxu0 0
      %235 = vmatpush1.bf16.msra.mxu0 0
      %236 = vmatprep.subr.bf16.mxu0 0
      %237 = vmatpush1.bf16.msra.mxu0 0
      %238 = vmatprep.subr.bf16.mxu0 0
      %239 = vmatpush1.bf16.msra.mxu0 0
      %240 = vmatprep.subr.bf16.mxu0 0
      %241 = vmatpush1.bf16.msra.mxu0 0
      %242 = vmatprep.mubr.bf16.mxu0 0
      %243 = vmatmul.mubr.bf16.gmra.mrb[0].mxu0 %v127
      %v244 = vpop.f32.mrb[0].mxu0
      %v245 = vadd.f32 %v183, %v244
      %v246 = vpop.f32.mrb[0].mxu0
      %v247 = vadd.f32 %v187, %v246
      %v248 = vpop.f32.mrb[0].mxu0
      %v249 = vpop.f32.mrb[0].mxu0
      %250 = vdwg.mxu0
      %v251 = vpack.c.bf16 %v245, %v245
      %v252 = vpack.c.bf16 %v247, %v247
      %v253 = vld [vmem:[#allocation8] sm:$0xf]
      %v254 = vld [vmem:[#allocation8 + $0x4] sm:$0xf]
      %v255 = vld [vmem:[#allocation8 + $0x8] sm:$0xf]
      %v256 = vld [vmem:[#allocation8 + $0xc] sm:$0xf]
      %v257 = vld [vmem:[#allocation8 + $0x10] sm:$0xf]
      %v258 = vld [vmem:[#allocation8 + $0x14] sm:$0xf]
      %v259 = vld [vmem:[#allocation8 + $0x18] sm:$0xf]
      %v260 = vld [vmem:[#allocation8 + $0x1c] sm:$0xf]
      %v261 = vld [vmem:[#allocation8 + $0x20] sm:$0xf]
      %v262 = vld [vmem:[#allocation8 + $0x24] sm:$0xf]
      %v263 = vld [vmem:[#allocation8 + $0x28] sm:$0xf]
      %v264 = vld [vmem:[#allocation8 + $0x2c] sm:$0xf]
      %v265 = vld [vmem:[#allocation8 + $0x30] sm:$0xf]
      %v266 = vld [vmem:[#allocation8 + $0x34] sm:$0xf]
      %v267 = vld [vmem:[#allocation8 + $0x38] sm:$0xf]
      %v268 = vld [vmem:[#allocation8 + $0x3c] sm:$0xf]
      %v269 = vld [vmem:[%s5] sm:$0x1]
      %v271 = vlaneseq
      %v272 = vshrl.u32 %v271, 7
      %v273 = vsub.s32 0, %v272
      %v274 = vrot.slane %v269, %v273
      %v292 = vunpack.c.l.b16 %v253
      %v293 = vunpack.c.l.b16 %v254
      %v294 = vunpack.c.l.b16 %v255
      %v295 = vunpack.c.l.b16 %v256
      %v296 = vunpack.c.l.b16 %v257
      %v297 = vunpack.c.l.b16 %v258
      %v298 = vunpack.c.l.b16 %v259
      %v299 = vunpack.c.l.b16 %v260
      %v300 = vunpack.c.l.b16 %v261
      %v301 = vunpack.c.l.b16 %v262
      %v302 = vunpack.c.l.b16 %v263
      %v303 = vunpack.c.l.b16 %v264
      %v304 = vunpack.c.l.b16 %v265
      %v305 = vunpack.c.l.b16 %v266
      %v306 = vunpack.c.l.b16 %v267
      %v307 = vunpack.c.l.b16 %v268
      %v308 = vpack.c.b16 %v293, %v292
      %v309 = vpack.c.b16 %v295, %v294
      %v310 = vpack.c.b16 %v297, %v296
      %v311 = vpack.c.b16 %v299, %v298
      %v312 = vpack.c.b16 %v301, %v300
      %v313 = vpack.c.b16 %v303, %v302
      %v314 = vpack.c.b16 %v305, %v304
      %v315 = vpack.c.b16 %v307, %v306
      %324 = vmatprep.subr.bf16.mxu0 0
      %325 = vmatpush1.bf16.msra.mxu0 %v308
      %326 = vmatprep.subr.bf16.mxu0 0
      %327 = vmatpush1.bf16.msra.mxu0 %v309
      %328 = vmatprep.subr.bf16.mxu0 0
      %329 = vmatpush1.bf16.msra.mxu0 %v310
      %330 = vmatprep.subr.bf16.mxu0 0
      %331 = vmatpush1.bf16.msra.mxu0 %v311
      %332 = vmatprep.subr.bf16.mxu0 0
      %333 = vmatpush1.bf16.msra.mxu0 %v312
      %334 = vmatprep.subr.bf16.mxu0 0
      %335 = vmatpush1.bf16.msra.mxu0 %v313
      %336 = vmatprep.subr.bf16.mxu0 0
      %337 = vmatpush1.bf16.msra.mxu0 %v314
      %338 = vmatprep.subr.bf16.mxu0 0
      %339 = vmatpush1.bf16.msra.mxu0 %v315
      %340 = vmatprep.subr.bf16.mxu0 0
      %341 = vmatpush1.bf16.msra.mxu0 0
      %342 = vmatprep.subr.bf16.mxu0 0
      %343 = vmatpush1.bf16.msra.mxu0 0
      %344 = vmatprep.subr.bf16.mxu0 0
      %345 = vmatpush1.bf16.msra.mxu0 0
      %346 = vmatprep.subr.bf16.mxu0 0
      %347 = vmatpush1.bf16.msra.mxu0 0
      %348 = vmatprep.subr.bf16.mxu0 0
      %349 = vmatpush1.bf16.msra.mxu0 0
      %350 = vmatprep.subr.bf16.mxu0 0
      %351 = vmatpush1.bf16.msra.mxu0 0
      %352 = vmatprep.subr.bf16.mxu0 0
      %353 = vmatpush1.bf16.msra.mxu0 0
      %354 = vmatprep.subr.bf16.mxu0 0
      %355 = vmatpush1.bf16.msra.mxu0 0
      %356 = vmatprep.mubr.bf16.mxu0 0
      %357 = vmatmul.mubr.bf16.gmra.mrb[0].mxu0 %v251
      %v358 = vpop.f32.mrb[0].mxu0
      %v359 = vadd.f32 %v274, %v358
      %v360 = vpop.f32.mrb[0].mxu0
      %v361 = vpop.f32.mrb[0].mxu0
      %v362 = vpop.f32.mrb[0].mxu0
      %363 = vdwg.mxu0
      %364 = vst [vmem:[#allocation12] sm:$0xff] %v359
      %v365 = vld [vmem:[#allocation10] sm:$0xf]
      %v366 = vld [vmem:[#allocation10 + $0x4] sm:$0xf]
      %v367 = vld [vmem:[#allocation10 + $0x8] sm:$0xf]
      %v368 = vld [vmem:[#allocation10 + $0xc] sm:$0xf]
      %v369 = vld [vmem:[#allocation10 + $0x10] sm:$0xf]
      %v370 = vld [vmem:[#allocation10 + $0x14] sm:$0xf]
      %v371 = vld [vmem:[#allocation10 + $0x18] sm:$0xf]
      %v372 = vld [vmem:[#allocation10 + $0x1c] sm:$0xf]
      %v373 = vld [vmem:[#allocation10 + $0x20] sm:$0xf]
      %v374 = vld [vmem:[#allocation10 + $0x24] sm:$0xf]
      %v375 = vld [vmem:[#allocation10 + $0x28] sm:$0xf]
      %v376 = vld [vmem:[#allocation10 + $0x2c] sm:$0xf]
      %v377 = vld [vmem:[#allocation10 + $0x30] sm:$0xf]
      %v378 = vld [vmem:[#allocation10 + $0x34] sm:$0xf]
      %v379 = vld [vmem:[#allocation10 + $0x38] sm:$0xf]
      %v380 = vld [vmem:[#allocation10 + $0x3c] sm:$0xf]
      %v381 = vld [vmem:[%s5 + $0x1] sm:$0x1]
      %v383 = vlaneseq
      %v384 = vshrl.u32 %v383, 7
      %v385 = vsub.s32 0, %v384
      %v386 = vrot.slane %v381, %v385
      %v404 = vunpack.c.l.b16 %v365
      %v405 = vunpack.c.l.b16 %v366
      %v406 = vunpack.c.l.b16 %v367
      %v407 = vunpack.c.l.b16 %v368
      %v408 = vunpack.c.l.b16 %v369
      %v409 = vunpack.c.l.b16 %v370
      %v410 = vunpack.c.l.b16 %v371
      %v411 = vunpack.c.l.b16 %v372
      %v412 = vunpack.c.l.b16 %v373
      %v413 = vunpack.c.l.b16 %v374
      %v414 = vunpack.c.l.b16 %v375
      %v415 = vunpack.c.l.b16 %v376
      %v416 = vunpack.c.l.b16 %v377
      %v417 = vunpack.c.l.b16 %v378
      %v418 = vunpack.c.l.b16 %v379
      %v419 = vunpack.c.l.b16 %v380
      %v420 = vpack.c.b16 %v405, %v404
      %v421 = vpack.c.b16 %v407, %v406
      %v422 = vpack.c.b16 %v409, %v408
      %v423 = vpack.c.b16 %v411, %v410
      %v424 = vpack.c.b16 %v413, %v412
      %v425 = vpack.c.b16 %v415, %v414
      %v426 = vpack.c.b16 %v417, %v416
      %v427 = vpack.c.b16 %v419, %v418
      %436 = vmatprep.subr.bf16.mxu0 0
      %437 = vmatpush1.bf16.msra.mxu0 %v420
      %438 = vmatprep.subr.bf16.mxu0 0
      %439 = vmatpush1.bf16.msra.mxu0 %v421
      %440 = vmatprep.subr.bf16.mxu0 0
      %441 = vmatpush1.bf16.msra.mxu0 %v422
      %442 = vmatprep.subr.bf16.mxu0 0
      %443 = vmatpush1.bf16.msra.mxu0 %v423
      %444 = vmatprep.subr.bf16.mxu0 0
      %445 = vmatpush1.bf16.msra.mxu0 %v424
      %446 = vmatprep.subr.bf16.mxu0 0
      %447 = vmatpush1.bf16.msra.mxu0 %v425
      %448 = vmatprep.subr.bf16.mxu0 0
      %449 = vmatpush1.bf16.msra.mxu0 %v426
      %450 = vmatprep.subr.bf16.mxu0 0
      %451 = vmatpush1.bf16.msra.mxu0 %v427
      %452 = vmatprep.subr.bf16.mxu0 0
      %453 = vmatpush1.bf16.msra.mxu0 0
      %454 = vmatprep.subr.bf16.mxu0 0
      %455 = vmatpush1.bf16.msra.mxu0 0
      %456 = vmatprep.subr.bf16.mxu0 0
      %457 = vmatpush1.bf16.msra.mxu0 0
      %458 = vmatprep.subr.bf16.mxu0 0
      %459 = vmatpush1.bf16.msra.mxu0 0
      %460 = vmatprep.subr.bf16.mxu0 0
      %461 = vmatpush1.bf16.msra.mxu0 0
      %462 = vmatprep.subr.bf16.mxu0 0
      %463 = vmatpush1.bf16.msra.mxu0 0
      %464 = vmatprep.subr.bf16.mxu0 0
      %465 = vmatpush1.bf16.msra.mxu0 0
      %466 = vmatprep.subr.bf16.mxu0 0
      %467 = vmatpush1.bf16.msra.mxu0 0
      %468 = vmatprep.mubr.bf16.mxu0 0
      %469 = vmatmul.mubr.bf16.gmra.mrb[0].mxu0 %v252
      %v470 = vpop.f32.mrb[0].mxu0
      %v471 = vadd.f32 %v386, %v470
      %v472 = vpop.f32.mrb[0].mxu0
      %v473 = vpop.f32.mrb[0].mxu0
      %v474 = vpop.f32.mrb[0].mxu0
      %475 = vdwg.mxu0
      %476 = vst [vmem:[#allocation12 + $0x8] sm:$0xff] %v471
    $region57: #{tpu_custom_call.1} parent=1 // pred_fallthru
      _
    // Predicated region
    $region58: #{tpu_custom_call.1} parent=1 // pred_check
      _
    $region59: #{tpu_custom_call.1} parent=1 // pred_check_branch
      %478 = sbr.rel (0) target = $region61
    $region60: #{tpu_custom_call.1} parent=1 // pred_region
      %s480 = ssub.s32 128, 128
      %481 = vsyncadd [#allocation4], %s480
      %s483 = sshll.u32 [#allocation11], 4
      %s484 = int_to_ptr.vmem [resolvable:$true] %s483
      %486 = dma.vmem_to_hbm [thread:$0]  %s484, 128, %s8, [#allocation4]
    $region61: #{tpu_custom_call.1} parent=1 // pred_fallthru
      _
    // Predicated region
    $region62: #{tpu_custom_call.1} parent=1 // pred_check
      _
    $region63: #{tpu_custom_call.1} parent=1 // pred_check_branch
      %488 = sbr.rel (0) target = $region65
    $region64: #{tpu_custom_call.1} parent=1 // pred_region
      %s490 = ssub.s32 256, 256
      %491 = vsyncadd [#allocation13], %s490
      %s493 = sshll.u32 [#allocation12], 4
      %s494 = int_to_ptr.vmem [resolvable:$true] %s493
      %496 = dma.vmem_to_hbm [thread:$0]  %s494, 256, %s9, [#allocation13]
    $region65: #{tpu_custom_call.1} parent=1 // pred_fallthru
      _
    // Predicated region
    $region66: #{tpu_custom_call.1} parent=1 // pred_check
      _
    $region67: #{tpu_custom_call.1} parent=1 // pred_check_branch
      %498 = sbr.rel (0) target = $region69
    $region68: #{tpu_custom_call.1} parent=1 // pred_region
      %499 = dma.done [#allocation4], 128
    $region69: #{tpu_custom_call.1} parent=1 // pred_fallthru
      _
    // Predicated region
    $region70: #{tpu_custom_call.1} parent=1 // pred_check
      _
    $region71: #{tpu_custom_call.1} parent=1 // pred_check_branch
      %501 = sbr.rel (0) target = $region73
    $region72: #{tpu_custom_call.1} parent=1 // pred_region
      %502 = dma.done [#allocation13], 256
    $region73: #{tpu_custom_call.1} parent=1 // pred_fallthru
      _
    %503 = vsyncpa [#allocation3], 1
    %504 = vsyncpa [#allocation6], 1
    %505 = vsyncpa [#allocation9], 1
    %506 = vsyncpa [#allocation4], 1
    %507 = vsyncpa [#allocation13], 1

// kernel: tpu_custom_call.1
$region0: #{tpu_custom_call.1}
  #allocation0 [shape = 'u32[]', space=smem, size = 0x4, offset = 0x4, fixed_abs, tag = 'smem constant byte address 0x4 - core index']
  #allocation1 [shape = 'u32[144,128]{1,0:T(1,128)}', space=vmem, size = 0x12000, scoped, tag = 'internal scratch']
  %s0 = inlined_call_operand.hbm [shape: f32[8,32], index: 0, kind: input, shape index: {}]
  %s1 = inlined_call_operand.hbm [shape: bf16[32,128], index: 1, kind: input, shape index: {}]
  %s2 = inlined_call_operand.vmem [shape: f32[1,128], index: 2, kind: input, shape index: {}]
  %s3 = inlined_call_operand.hbm [shape: bf16[32,256], index: 3, kind: input, shape index: {}]
  %s4 = inlined_call_operand.vmem [shape: f32[1,256], index: 4, kind: input, shape index: {}]
  %s5 = inlined_call_operand.vmem [shape: f32[1,256], index: 5, kind: input, shape index: {}]
  %s6 = inlined_call_operand.hbm [shape: bf16[128,128], index: 6, kind: input, shape index: {}]
  %s7 = inlined_call_operand.hbm [shape: bf16[128,128], index: 7, kind: input, shape index: {}]
  %s8 = inlined_call_operand.hbm [shape: f32[8,128], index: 8, kind: output, shape index: {0}]
  %s9 = inlined_call_operand.hbm [shape: f32[8,256], index: 9, kind: output, shape index: {1}]
  %10 = xla_tuple %s8, %s9
  %s11 = sld [smem:[#allocation0]]
  $region74: #{tpu_custom_call.1} parent=0
    _
  %s13 = ssub.s32 1, %s11
  %s14 = scalar_select 0, %s13, %s11
  $region1: #{tpu_custom_call.1} parent=0
    #allocation2 [shape = 'u8[4096]{0}', space=vmem, size = 0x1000, scoped, tag = 'input window, operand 0, single buffered']
    #allocation3 [shape = 's32[1]{0}', space=sflag, size = 0x4, scoped, tag = 'scoped memory for tpu_custom_call.1']
    #allocation4 [shape = 's32[1]{0}', space=sflag, size = 0x4, scoped, tag = 'scoped memory for tpu_custom_call.1']
    #allocation5 [shape = 'u8[8192]{0}', space=vmem, size = 0x2000, scoped, tag = 'input window, operand 1, single buffered']
    #allocation6 [shape = 's32[1]{0}', space=sflag, size = 0x4, scoped, tag = 'scoped memory for tpu_custom_call.1']
    #allocation7 [shape = 'u8[16384]{0}', space=vmem, size = 0x4000, scoped, tag = 'input window, operand 3, single buffered']
    #allocation8 [shape = 'u8[32768]{0}', space=vmem, size = 0x8000, scoped, tag = 'input window, operand 6, single buffered']
    #allocation9 [shape = 's32[1]{0}', space=sflag, size = 0x4, scoped, tag = 'scoped memory for tpu_custom_call.1']
    #allocation10 [shape = 'u8[32768]{0}', space=vmem, size = 0x8000, scoped, tag = 'input window, operand 7, single buffered']
    #allocation11 [shape = 'u8[4096]{0}', space=vmem, size = 0x1000, scoped, tag = 'output window, operand 0, single buffered']
    #allocation12 [shape = 'u8[8192]{0}', space=vmem, size = 0x2000, scoped, tag = 'output window, operand 1, single buffered']
    #allocation13 [shape = 's32[1]{0}', space=sflag, size = 0x4, scoped, tag = 'scoped memory for tpu_custom_call.1']
    %15 = vsyncpa [#allocation3], 0
    %16 = vsyncpa [#allocation6], 0
    %17 = vsyncpa [#allocation9], 0
    %18 = vsyncpa [#allocation4], 0
    %19 = vsyncpa [#allocation13], 0
    // Predicated region
    $region2: #{tpu_custom_call.1} parent=1 // pred_check
      _
    $region3: #{tpu_custom_call.1} parent=1 // pred_check_branch
      %21 = sbr.rel (0) target = $region5
    $region4: #{tpu_custom_call.1} parent=1 // pred_region
      %s23 = ssub.s32 128, 128
      %24 = vsyncadd [#allocation3], %s23
      %s26 = sshll.u32 [#allocation2], 4
      %s27 = int_to_ptr.vmem [resolvable:$true] %s26
      %29 = dma.hbm_to_vmem [thread:$0]  %s0, 128, %s27, [#allocation3]
    $region5: #{tpu_custom_call.1} parent=1 // pred_fallthru
      _
    // Predicated region
    $region6: #{tpu_custom_call.1} parent=1 // pred_check
      _
    $region7: #{tpu_custom_call.1} parent=1 // pred_check_branch
      %31 = sbr.rel (0) target = $region9
    $region8: #{tpu_custom_call.1} parent=1 // pred_region
      %s33 = ssub.s32 256, 256
      %34 = vsyncadd [#allocation6], %s33
      %s35 = sshll.u32 [#allocation5], 4
      %s36 = int_to_ptr.vmem [resolvable:$true] %s35
      %41 = dma.hbm_to_vmem [thread:$0]  %s1, 256, %s36, [#allocation6], 64, 64, 4
    $region9: #{tpu_custom_call.1} parent=1 // pred_fallthru
      _
    // Predicated region
    $region10: #{tpu_custom_call.1} parent=1 // pred_check
      _
    $region11: #{tpu_custom_call.1} parent=1 // pred_check_branch
      %43 = sbr.rel (0) target = $region13
    $region12: #{tpu_custom_call.1} parent=1 // pred_region
      _
    $region13: #{tpu_custom_call.1} parent=1 // pred_fallthru
      _
    // Predicated region
    $region14: #{tpu_custom_call.1} parent=1 // pred_check
      _
    $region15: #{tpu_custom_call.1} parent=1 // pred_check_branch
      %45 = sbr.rel (0) target = $region17
    $region16: #{tpu_custom_call.1} parent=1 // pred_region
      %s47 = ssub.s32 512, 512
      %48 = vsyncadd [#allocation6], %s47
      %s49 = sshll.u32 [#allocation7], 4
      %s50 = int_to_ptr.vmem [resolvable:$true] %s49
      %55 = dma.hbm_to_vmem [thread:$0]  %s3, 512, %s50, [#allocation6], 128, 128, 8
    $region17: #{tpu_custom_call.1} parent=1 // pred_fallthru
      _
    // Predicated region
    $region18: #{tpu_custom_call.1} parent=1 // pred_check
      _
    $region19: #{tpu_custom_call.1} parent=1 // pred_check_branch
      %57 = sbr.rel (0) target = $region21
    $region20: #{tpu_custom_call.1} parent=1 // pred_region
      _
    $region21: #{tpu_custom_call.1} parent=1 // pred_fallthru
      _
    // Predicated region
    $region22: #{tpu_custom_call.1} parent=1 // pred_check
      _
    $region23: #{tpu_custom_call.1} parent=1 // pred_check_branch
      %59 = sbr.rel (0) target = $region25
    $region24: #{tpu_custom_call.1} parent=1 // pred_region
      _
    $region25: #{tpu_custom_call.1} parent=1 // pred_fallthru
      _
    // Predicated region
    $region26: #{tpu_custom_call.1} parent=1 // pred_check
      _
    $region27: #{tpu_custom_call.1} parent=1 // pred_check_branch
      %61 = sbr.rel (0) target = $region29
    $region28: #{tpu_custom_call.1} parent=1 // pred_region
      %s63 = ssub.s32 1024, 1024
      %64 = vsyncadd [#allocation9], %s63
      %s65 = sshll.u32 [#allocation8], 4
      %s66 = int_to_ptr.vmem [resolvable:$true] %s65
      %71 = dma.hbm_to_vmem [thread:$0]  %s6, 1024, %s66, [#allocation9], 64, 64, 4
    $region29: #{tpu_custom_call.1} parent=1 // pred_fallthru
      _
    // Predicated region
    $region30: #{tpu_custom_call.1} parent=1 // pred_check
      _
    $region31: #{tpu_custom_call.1} parent=1 // pred_check_branch
      %73 = sbr.rel (0) target = $region33
    $region32: #{tpu_custom_call.1} parent=1 // pred_region
      %s75 = ssub.s32 1024, 1024
      %76 = vsyncadd [#allocation9], %s75
      %s77 = sshll.u32 [#allocation10], 4
      %s78 = int_to_ptr.vmem [resolvable:$true] %s77
      %83 = dma.hbm_to_vmem [thread:$0]  %s7, 1024, %s78, [#allocation9], 64, 64, 4
    $region33: #{tpu_custom_call.1} parent=1 // pred_fallthru
      _
    // Predicated region
    $region34: #{tpu_custom_call.1} parent=1 // pred_check
      _
    $region35: #{tpu_custom_call.1} parent=1 // pred_check_branch
      %85 = sbr.rel (0) target = $region37
    $region36: #{tpu_custom_call.1} parent=1 // pred_region
      %86 = dma.done [#allocation3], 128
    $region37: #{tpu_custom_call.1} parent=1 // pred_fallthru
      _
    // Predicated region
    $region38: #{tpu_custom_call.1} parent=1 // pred_check
      _
    $region39: #{tpu_custom_call.1} parent=1 // pred_check_branch
      %88 = sbr.rel (0) target = $region41
    $region40: #{tpu_custom_call.1} parent=1 // pred_region
      %89 = dma.done [#allocation6], 256
    $region41: #{tpu_custom_call.1} parent=1 // pred_fallthru
      _
    // Predicated region
    $region42: #{tpu_custom_call.1} parent=1 // pred_check
      _
    $region43: #{tpu_custom_call.1} parent=1 // pred_check_branch
      %91 = sbr.rel (0) target = $region45
    $region44: #{tpu_custom_call.1} parent=1 // pred_region
      %92 = dma.done [#allocation6], 512
    $region45: #{tpu_custom_call.1} parent=1 // pred_fallthru
      _
    // Predicated region
    $region46: #{tpu_custom_call.1} parent=1 // pred_check
      _
    $region47: #{tpu_custom_call.1} parent=1 // pred_check_branch
      %94 = sbr.rel (0) target = $region49
    $region48: #{tpu_custom_call.1} parent=1 // pred_region
      %95 = dma.done [#allocation9], 1024
    $region49: #{tpu_custom_call.1} parent=1 // pred_fallthru
      _
    // Predicated region
    $region50: #{tpu_custom_call.1} parent=1 // pred_check
      _
    $region51: #{tpu_custom_call.1} parent=1 // pred_check_branch
      %97 = sbr.rel (0) target = $region53
    $region52: #{tpu_custom_call.1} parent=1 // pred_region
      %98 = dma.done [#allocation9], 1024
    $region53: #{tpu_custom_call.1} parent=1 // pred_fallthru
      _
    %v100 = vld [vmem:[#allocation2] sm:$0xff]
    %v101 = vpack.c.bf16 %v100, %v100
    %v102 = vld [vmem:[#allocation5] sm:$0xf]
    %v103 = vld [vmem:[#allocation5 + $0x4] sm:$0xf]
    %v104 = vld [vmem:[#allocation5 + $0x8] sm:$0xf]
    %v105 = vld [vmem:[#allocation5 + $0xc] sm:$0xf]
    %v106 = vld [vmem:[%s2] sm:$0x1]
    %v108 = vlaneseq
    %v109 = vshrl.u32 %v108, 7
    %v110 = vsub.s32 0, %v109
    %v111 = vrot.slane %v106, %v110
    %v117 = vunpack.c.l.b16 %v102
    %v118 = vunpack.c.l.b16 %v103
    %v119 = vunpack.c.l.b16 %v104
    %v120 = vunpack.c.l.b16 %v105
    %v121 = vpack.c.b16 %v118, %v117
    %v122 = vpack.c.b16 %v120, %v119
    %vm125 = vcmask 261120
    %v127 = vsel %vm125, %v101, 0
    %129 = vmatprep.subr.bf16.mxu0 0
    %130 = vmatpush1.bf16.msra.mxu0 %v121
    %131 = vmatprep.subr.bf16.mxu0 0
    %132 = vmatpush1.bf16.msra.mxu0 %v122
    %133 = vmatprep.subr.bf16.mxu0 0
    %134 = vmatpush1.bf16.msra.mxu0 0
    %135 = vmatprep.subr.bf16.mxu0 0
    %136 = vmatpush1.bf16.msra.mxu0 0
    %137 = vmatprep.subr.bf16.mxu0 0
    %138 = vmatpush1.bf16.msra.mxu0 0
    %139 = vmatprep.subr.bf16.mxu0 0
    %140 = vmatpush1.bf16.msra.mxu0 0
    %141 = vmatprep.subr.bf16.mxu0 0
    %142 = vmatpush1.bf16.msra.mxu0 0
    %143 = vmatprep.subr.bf16.mxu0 0
    %144 = vmatpush1.bf16.msra.mxu0 0
    %145 = vmatprep.subr.bf16.mxu0 0
    %146 = vmatpush1.bf16.msra.mxu0 0
    %147 = vmatprep.subr.bf16.mxu0 0
    %148 = vmatpush1.bf16.msra.mxu0 0
    %149 = vmatprep.subr.bf16.mxu0 0
    %150 = vmatpush1.bf16.msra.mxu0 0
    %151 = vmatprep.subr.bf16.mxu0 0
    %152 = vmatpush1.bf16.msra.mxu0 0
    %153 = vmatprep.subr.bf16.mxu0 0
    %154 = vmatpush1.bf16.msra.mxu0 0
    %155 = vmatprep.subr.bf16.mxu0 0
    %156 = vmatpush1.bf16.msra.mxu0 0
    %157 = vmatprep.subr.bf16.mxu0 0
    %158 = vmatpush1.bf16.msra.mxu0 0
    %159 = vmatprep.subr.bf16.mxu0 0
    %160 = vmatpush1.bf16.msra.mxu0 0
    %161 = vmatprep.mubr.bf16.mxu0 0
    %162 = vmatmul.mubr.bf16.gmra.mrb[0].mxu0 %v127
    %v163 = vpop.f32.mrb[0].mxu0
    %v164 = vadd.f32 %v111, %v163
    %v165 = vpop.f32.mrb[0].mxu0
    %v166 = vpop.f32.mrb[0].mxu0
    %v167 = vpop.f32.mrb[0].mxu0
    %168 = vdwg.mxu0
    %169 = vst [vmem:[#allocation11] sm:$0xff] %v164
    %p170 = scmp.eq.s32.totalorder 0, 0
    // Predicated region
    $region54: #{tpu_custom_call.1} parent=1 // pred_check
      %p171 = pneg %p170
    $region55: #{tpu_custom_call.1} parent=1 // pred_check_branch
      %173 = sbr.rel (%p171) target = $region57
    $region56: #{tpu_custom_call.1} parent=1 // pred_region
      %v174 = vld [vmem:[#allocation7] sm:$0xff]
      %v175 = vld [vmem:[#allocation7 + $0x8] sm:$0xff]
      %v176 = vld [vmem:[#allocation7 + $0x10] sm:$0xff]
      %v177 = vld [vmem:[#allocation7 + $0x18] sm:$0xff]
      %v178 = vld [vmem:[%s4] sm:$0x3]
      %v180 = vlaneseq
      %v181 = vshrl.u32 %v180, 7
      %v182 = vsub.s32 0, %v181
      %v183 = vrot.slane %v178, %v182
      %v184 = vlaneseq
      %v185 = vshrl.u32 %v184, 7
      %v186 = vsub.s32 1, %v185
      %v187 = vrot.slane %v178, %v186
      %v194 = vunpack.c.l.b16 %v174
      %v195 = vunpack.c.h.b16 %v174
      %v196 = vunpack.c.l.b16 %v175
      %v197 = vunpack.c.h.b16 %v175
      %v198 = vunpack.c.l.b16 %v176
      %v199 = vunpack.c.h.b16 %v176
      %v200 = vunpack.c.l.b16 %v177
      %v201 = vunpack.c.h.b16 %v177
      %v202 = vpack.c.b16 %v196, %v194
      %v203 = vpack.c.b16 %v197, %v195
      %v204 = vpack.c.b16 %v200, %v198
      %v205 = vpack.c.b16 %v201, %v199
      %210 = vmatprep.subr.bf16.mxu0 %v203
      %211 = vmatpush1.bf16.msra.mxu0 %v202
      %212 = vmatprep.subr.bf16.mxu0 %v205
      %213 = vmatpush1.bf16.msra.mxu0 %v204
      %214 = vmatprep.subr.bf16.mxu0 0
      %215 = vmatpush1.bf16.msra.mxu0 0
      %216 = vmatprep.subr.bf16.mxu0 0
      %217 = vmatpush1.bf16.msra.mxu0 0
      %218 = vmatprep.subr.bf16.mxu0 0
      %219 = vmatpush1.bf16.msra.mxu0 0
      %220 = vmatprep.subr.bf16.mxu0 0
      %221 = vmatpush1.bf16.msra.mxu0 0
      %222 = vmatprep.subr.bf16.mxu0 0
      %223 = vmatpush1.bf16.msra.mxu0 0
      %224 = vmatprep.subr.bf16.mxu0 0
      %225 = vmatpush1.bf16.msra.mxu0 0
      %226 = vmatprep.subr.bf16.mxu0 0
      %227 = vmatpush1.bf16.msra.mxu0 0
      %228 = vmatprep.subr.bf16.mxu0 0
      %229 = vmatpush1.bf16.msra.mxu0 0
      %230 = vmatprep.subr.bf16.mxu0 0
      %231 = vmatpush1.bf16.msra.mxu0 0
      %232 = vmatprep.subr.bf16.mxu0 0
      %233 = vmatpush1.bf16.msra.mxu0 0
      %234 = vmatprep.subr.bf16.mxu0 0
      %235 = vmatpush1.bf16.msra.mxu0 0
      %236 = vmatprep.subr.bf16.mxu0 0
      %237 = vmatpush1.bf16.msra.mxu0 0
      %238 = vmatprep.subr.bf16.mxu0 0
      %239 = vmatpush1.bf16.msra.mxu0 0
      %240 = vmatprep.subr.bf16.mxu0 0
      %241 = vmatpush1.bf16.msra.mxu0 0
      %242 = vmatprep.mubr.bf16.mxu0 0
      %243 = vmatmul.mubr.bf16.gmra.mrb[0].mxu0 %v127
      %v244 = vpop.f32.mrb[0].mxu0
      %v245 = vadd.f32 %v183, %v244
      %v246 = vpop.f32.mrb[0].mxu0
      %v247 = vadd.f32 %v187, %v246
      %v248 = vpop.f32.mrb[0].mxu0
      %v249 = vpop.f32.mrb[0].mxu0
      %250 = vdwg.mxu0
      %v251 = vpack.c.bf16 %v245, %v245
      %v252 = vpack.c.bf16 %v247, %v247
      %v253 = vld [vmem:[#allocation8] sm:$0xf]
      %v254 = vld [vmem:[#allocation8 + $0x4] sm:$0xf]
      %v255 = vld [vmem:[#allocation8 + $0x8] sm:$0xf]
      %v256 = vld [vmem:[#allocation8 + $0xc] sm:$0xf]
      %v257 = vld [vmem:[#allocation8 + $0x10] sm:$0xf]
      %v258 = vld [vmem:[#allocation8 + $0x14] sm:$0xf]
      %v259 = vld [vmem:[#allocation8 + $0x18] sm:$0xf]
      %v260 = vld [vmem:[#allocation8 + $0x1c] sm:$0xf]
      %v261 = vld [vmem:[#allocation8 + $0x20] sm:$0xf]
      %v262 = vld [vmem:[#allocation8 + $0x24] sm:$0xf]
      %v263 = vld [vmem:[#allocation8 + $0x28] sm:$0xf]
      %v264 = vld [vmem:[#allocation8 + $0x2c] sm:$0xf]
      %v265 = vld [vmem:[#allocation8 + $0x30] sm:$0xf]
      %v266 = vld [vmem:[#allocation8 + $0x34] sm:$0xf]
      %v267 = vld [vmem:[#allocation8 + $0x38] sm:$0xf]
      %v268 = vld [vmem:[#allocation8 + $0x3c] sm:$0xf]
      %v269 = vld [vmem:[%s5] sm:$0x1]
      %v271 = vlaneseq
      %v272 = vshrl.u32 %v271, 7
      %v273 = vsub.s32 0, %v272
      %v274 = vrot.slane %v269, %v273
      %v292 = vunpack.c.l.b16 %v253
      %v293 = vunpack.c.l.b16 %v254
      %v294 = vunpack.c.l.b16 %v255
      %v295 = vunpack.c.l.b16 %v256
      %v296 = vunpack.c.l.b16 %v257
      %v297 = vunpack.c.l.b16 %v258
      %v298 = vunpack.c.l.b16 %v259
      %v299 = vunpack.c.l.b16 %v260
      %v300 = vunpack.c.l.b16 %v261
      %v301 = vunpack.c.l.b16 %v262
      %v302 = vunpack.c.l.b16 %v263
      %v303 = vunpack.c.l.b16 %v264
      %v304 = vunpack.c.l.b16 %v265
      %v305 = vunpack.c.l.b16 %v266
      %v306 = vunpack.c.l.b16 %v267
      %v307 = vunpack.c.l.b16 %v268
      %v308 = vpack.c.b16 %v293, %v292
      %v309 = vpack.c.b16 %v295, %v294
      %v310 = vpack.c.b16 %v297, %v296
      %v311 = vpack.c.b16 %v299, %v298
      %v312 = vpack.c.b16 %v301, %v300
      %v313 = vpack.c.b16 %v303, %v302
      %v314 = vpack.c.b16 %v305, %v304
      %v315 = vpack.c.b16 %v307, %v306
      %324 = vmatprep.subr.bf16.mxu0 0
      %325 = vmatpush1.bf16.msra.mxu0 %v308
      %326 = vmatprep.subr.bf16.mxu0 0
      %327 = vmatpush1.bf16.msra.mxu0 %v309
      %328 = vmatprep.subr.bf16.mxu0 0
      %329 = vmatpush1.bf16.msra.mxu0 %v310
      %330 = vmatprep.subr.bf16.mxu0 0
      %331 = vmatpush1.bf16.msra.mxu0 %v311
      %332 = vmatprep.subr.bf16.mxu0 0
      %333 = vmatpush1.bf16.msra.mxu0 %v312
      %334 = vmatprep.subr.bf16.mxu0 0
      %335 = vmatpush1.bf16.msra.mxu0 %v313
      %336 = vmatprep.subr.bf16.mxu0 0
      %337 = vmatpush1.bf16.msra.mxu0 %v314
      %338 = vmatprep.subr.bf16.mxu0 0
      %339 = vmatpush1.bf16.msra.mxu0 %v315
      %340 = vmatprep.subr.bf16.mxu0 0
      %341 = vmatpush1.bf16.msra.mxu0 0
      %342 = vmatprep.subr.bf16.mxu0 0
      %343 = vmatpush1.bf16.msra.mxu0 0
      %344 = vmatprep.subr.bf16.mxu0 0
      %345 = vmatpush1.bf16.msra.mxu0 0
      %346 = vmatprep.subr.bf16.mxu0 0
      %347 = vmatpush1.bf16.msra.mxu0 0
      %348 = vmatprep.subr.bf16.mxu0 0
      %349 = vmatpush1.bf16.msra.mxu0 0
      %350 = vmatprep.subr.bf16.mxu0 0
      %351 = vmatpush1.bf16.msra.mxu0 0
      %352 = vmatprep.subr.bf16.mxu0 0
      %353 = vmatpush1.bf16.msra.mxu0 0
      %354 = vmatprep.subr.bf16.mxu0 0
      %355 = vmatpush1.bf16.msra.mxu0 0
      %356 = vmatprep.mubr.bf16.mxu0 0
      %357 = vmatmul.mubr.bf16.gmra.mrb[0].mxu0 %v251
      %v358 = vpop.f32.mrb[0].mxu0
      %v359 = vadd.f32 %v274, %v358
      %v360 = vpop.f32.mrb[0].mxu0
      %v361 = vpop.f32.mrb[0].mxu0
      %v362 = vpop.f32.mrb[0].mxu0
      %363 = vdwg.mxu0
      %364 = vst [vmem:[#allocation12] sm:$0xff] %v359
      %v365 = vld [vmem:[#allocation10] sm:$0xf]
      %v366 = vld [vmem:[#allocation10 + $0x4] sm:$0xf]
      %v367 = vld [vmem:[#allocation10 + $0x8] sm:$0xf]
      %v368 = vld [vmem:[#allocation10 + $0xc] sm:$0xf]
      %v369 = vld [vmem:[#allocation10 + $0x10] sm:$0xf]
      %v370 = vld [vmem:[#allocation10 + $0x14] sm:$0xf]
      %v371 = vld [vmem:[#allocation10 + $0x18] sm:$0xf]
      %v372 = vld [vmem:[#allocation10 + $0x1c] sm:$0xf]
      %v373 = vld [vmem:[#allocation10 + $0x20] sm:$0xf]
      %v374 = vld [vmem:[#allocation10 + $0x24] sm:$0xf]
      %v375 = vld [vmem:[#allocation10 + $0x28] sm:$0xf]
      %v376 = vld [vmem:[#allocation10 + $0x2c] sm:$0xf]
      %v377 = vld [vmem:[#allocation10 + $0x30] sm:$0xf]
      %v378 = vld [vmem:[#allocation10 + $0x34] sm:$0xf]
      %v379 = vld [vmem:[#allocation10 + $0x38] sm:$0xf]
      %v380 = vld [vmem:[#allocation10 + $0x3c] sm:$0xf]
      %v381 = vld [vmem:[%s5 + $0x1] sm:$0x1]
      %v383 = vlaneseq
      %v384 = vshrl.u32 %v383, 7
      %v385 = vsub.s32 0, %v384
      %v386 = vrot.slane %v381, %v385
      %v404 = vunpack.c.l.b16 %v365
      %v405 = vunpack.c.l.b16 %v366
      %v406 = vunpack.c.l.b16 %v367
      %v407 = vunpack.c.l.b16 %v368
      %v408 = vunpack.c.l.b16 %v369
      %v409 = vunpack.c.l.b16 %v370
      %v410 = vunpack.c.l.b16 %v371
      %v411 = vunpack.c.l.b16 %v372
      %v412 = vunpack.c.l.b16 %v373
      %v413 = vunpack.c.l.b16 %v374
      %v414 = vunpack.c.l.b16 %v375
      %v415 = vunpack.c.l.b16 %v376
      %v416 = vunpack.c.l.b16 %v377
      %v417 = vunpack.c.l.b16 %v378
      %v418 = vunpack.c.l.b16 %v379
      %v419 = vunpack.c.l.b16 %v380
      %v420 = vpack.c.b16 %v405, %v404
      %v421 = vpack.c.b16 %v407, %v406
      %v422 = vpack.c.b16 %v409, %v408
      %v423 = vpack.c.b16 %v411, %v410
      %v424 = vpack.c.b16 %v413, %v412
      %v425 = vpack.c.b16 %v415, %v414
      %v426 = vpack.c.b16 %v417, %v416
      %v427 = vpack.c.b16 %v419, %v418
      %436 = vmatprep.subr.bf16.mxu0 0
      %437 = vmatpush1.bf16.msra.mxu0 %v420
      %438 = vmatprep.subr.bf16.mxu0 0
      %439 = vmatpush1.bf16.msra.mxu0 %v421
      %440 = vmatprep.subr.bf16.mxu0 0
      %441 = vmatpush1.bf16.msra.mxu0 %v422
      %442 = vmatprep.subr.bf16.mxu0 0
      %443 = vmatpush1.bf16.msra.mxu0 %v423
      %444 = vmatprep.subr.bf16.mxu0 0
      %445 = vmatpush1.bf16.msra.mxu0 %v424
      %446 = vmatprep.subr.bf16.mxu0 0
      %447 = vmatpush1.bf16.msra.mxu0 %v425
      %448 = vmatprep.subr.bf16.mxu0 0
      %449 = vmatpush1.bf16.msra.mxu0 %v426
      %450 = vmatprep.subr.bf16.mxu0 0
      %451 = vmatpush1.bf16.msra.mxu0 %v427
      %452 = vmatprep.subr.bf16.mxu0 0
      %453 = vmatpush1.bf16.msra.mxu0 0
      %454 = vmatprep.subr.bf16.mxu0 0
      %455 = vmatpush1.bf16.msra.mxu0 0
      %456 = vmatprep.subr.bf16.mxu0 0
      %457 = vmatpush1.bf16.msra.mxu0 0
      %458 = vmatprep.subr.bf16.mxu0 0
      %459 = vmatpush1.bf16.msra.mxu0 0
      %460 = vmatprep.subr.bf16.mxu0 0
      %461 = vmatpush1.bf16.msra.mxu0 0
      %462 = vmatprep.subr.bf16.mxu0 0
      %463 = vmatpush1.bf16.msra.mxu0 0
      %464 = vmatprep.subr.bf16.mxu0 0
      %465 = vmatpush1.bf16.msra.mxu0 0
      %466 = vmatprep.subr.bf16.mxu0 0
      %467 = vmatpush1.bf16.msra.mxu0 0
      %468 = vmatprep.mubr.bf16.mxu0 0
      %469 = vmatmul.mubr.bf16.gmra.mrb[0].mxu0 %v252
      %v470 = vpop.f32.mrb[0].mxu0
      %v471 = vadd.f32 %v386, %v470
      %v472 = vpop.f32.mrb[0].mxu0
      %v473 = vpop.f32.mrb[0].mxu0
      %v474 = vpop.f32.mrb[0].mxu0
      %475 = vdwg.mxu0
      %476 = vst [vmem:[#allocation12 + $0x8] sm:$0xff] %v471
    $region57: #{tpu_custom_call.1} parent=1 // pred_fallthru
      _
    // Predicated region
    $region58: #{tpu_custom_call.1} parent=1 // pred_check
      _
    $region59: #{tpu_custom_call.1} parent=1 // pred_check_branch
      %478 = sbr.rel (0) target = $region61
    $region60: #{tpu_custom_call.1} parent=1 // pred_region
      %s480 = ssub.s32 128, 128
      %481 = vsyncadd [#allocation4], %s480
      %s483 = sshll.u32 [#allocation11], 4
      %s484 = int_to_ptr.vmem [resolvable:$true] %s483
      %486 = dma.vmem_to_hbm [thread:$0]  %s484, 128, %s8, [#allocation4]
    $region61: #{tpu_custom_call.1} parent=1 // pred_fallthru
      _
    // Predicated region
    $region62: #{tpu_custom_call.1} parent=1 // pred_check
      _
    $region63: #{tpu_custom_call.1} parent=1 // pred_check_branch
      %488 = sbr.rel (0) target = $region65
    $region64: #{tpu_custom_call.1} parent=1 // pred_region
      %s490 = ssub.s32 256, 256
      %491 = vsyncadd [#allocation13], %s490
      %s493 = sshll.u32 [#allocation12], 4
      %s494 = int_to_ptr.vmem [resolvable:$true] %s493
      %496 = dma.vmem_to_hbm [thread:$0]  %s494, 256, %s9, [#allocation13]
    $region65: #{tpu_custom_call.1} parent=1 // pred_fallthru
      _
    // Predicated region
    $region66: #{tpu_custom_call.1} parent=1 // pred_check
      _
    $region67: #{tpu_custom_call.1} parent=1 // pred_check_branch
      %498 = sbr.rel (0) target = $region69
    $region68: #{tpu_custom_call.1} parent=1 // pred_region
      %499 = dma.done [#allocation4], 128
    $region69: #{tpu_custom_call.1} parent=1 // pred_fallthru
      _
    // Predicated region
    $region70: #{tpu_custom_call.1} parent=1 // pred_check
      _
    $region71: #{tpu_custom_call.1} parent=1 // pred_check_branch
      %501 = sbr.rel (0) target = $region73
    $region72: #{tpu_custom_call.1} parent=1 // pred_region
      %502 = dma.done [#allocation13], 256
    $region73: #{tpu_custom_call.1} parent=1 // pred_fallthru
      _
    %503 = vsyncpa [#allocation3], 1
    %504 = vsyncpa [#allocation6], 1
    %505 = vsyncpa [#allocation9], 1
    %506 = vsyncpa [#allocation4], 1
    %507 = vsyncpa [#allocation13], 1

</llo_original>
